<compile_context>
chip_gen: v7x
topology: tpu7x:2x2x1
jax: 0.10.0
libtpu: 0.0.40
codegen_flags: <defaults>
</compile_context>

<pallas_src>
import math

import jax
import jax.numpy as jnp
from jax.experimental import pallas as pl
from jax.experimental.pallas import tpu as pltpu

WATERMARK_SIZE = 32
STYLE_DIM = 512
N_MLP = 8
LR_MLP = 0.01
NEG_SLOPE = 0.2
FLRELU_SCALE = math.sqrt(2.0)


def _fused_lrelu(y):
    """fused_leaky_relu body (bias already added): leaky_relu(0.2) * sqrt(2)."""
    return jnp.where(y >= 0.0, y, jnp.float32(NEG_SLOPE) * y) * jnp.float32(FLRELU_SCALE)


def fused_mapping_kernel(x_ref, w0_ref, w_ref, b_ref, o_ref, act_ref):
    """One grid step = one EqualLinear + fused leaky-relu layer.

    x_ref  : (B, 32)   f32   watermark input (VMEM-resident, read at l==0)
    w0_ref : (32, 512) bf16  scale-folded layer-0 weight (VMEM-resident)
    w_ref  : (1, 512, 512) bf16  scale-folded weight of layer l (l>=1), pipelined
    b_ref  : (1, 1, 512) f32 lr_mul-folded bias of layer l
    o_ref  : (B, 512)  f32   output (written at l==last)
    act_ref: (B, 512)  bf16  VMEM scratch, activation carried across layers
    """
    l = pl.program_id(0)

    @pl.when(l == 0)
    def _():
        y = jnp.dot(x_ref[...].astype(jnp.bfloat16), w0_ref[...],
                    preferred_element_type=jnp.float32) + b_ref[0]
        act_ref[...] = _fused_lrelu(y).astype(jnp.bfloat16)

    @pl.when(l > 0)
    def _():
        y = jnp.dot(act_ref[...], w_ref[0],
                    preferred_element_type=jnp.float32) + b_ref[0]
        act_ref[...] = _fused_lrelu(y).astype(jnp.bfloat16)

    @pl.when(l == pl.num_programs(0) - 1)
    def _():
        o_ref[...] = act_ref[...].astype(o_ref.dtype)


def e_watermark_forward(watermark_in, packed_params):
    """Full 8-layer mapping network as a single fused pallas_call."""
    w0, w_stacked, b_stacked = packed_params
    B, wm = watermark_in.shape
    x = watermark_in.astype(jnp.float32)
    return pl.pallas_call(
        fused_mapping_kernel,
        out_shape=jax.ShapeDtypeStruct((B, STYLE_DIM), watermark_in.dtype),
        grid=(N_MLP,),
        in_specs=[
            pl.BlockSpec((B, wm), lambda l: (0, 0)),                  # x (resident)
            pl.BlockSpec((wm, STYLE_DIM), lambda l: (0, 0)),          # W0 (resident)
            pl.BlockSpec((1, STYLE_DIM, STYLE_DIM),                   # W[l], l>=1 (pipelined)
                         lambda l: (jnp.maximum(l - 1, 0), 0, 0)),
            pl.BlockSpec((1, 1, STYLE_DIM), lambda l: (l, 0, 0)),     # b[l]
        ],
        out_specs=pl.BlockSpec((B, STYLE_DIM), lambda l: (0, 0)),     # resident output
        scratch_shapes=[pltpu.VMEM((B, STYLE_DIM), jnp.bfloat16)],    # activation carry
        compiler_params=pltpu.CompilerParams(
            dimension_semantics=("arbitrary",)),                      # strict layer dependency
    )(x, w0, w_stacked, b_stacked)


def init_raw_params(key, watermark_size=WATERMARK_SIZE, style_dim=STYLE_DIM,
                    n_mlp=N_MLP, lr_mul=LR_MLP):
    """Synthetic params matching EqualLinear.__init__ (PyTorch layout):
       weight ~ randn(out_dim, in_dim) / lr_mul, bias = zeros(out_dim)."""
    params = []
    dims = [watermark_size] + [style_dim] * n_mlp
    for i in range(n_mlp):
        key, wk = jax.random.split(key)
        in_dim, out_dim = dims[i], dims[i + 1]
        w = jax.random.normal(wk, (out_dim, in_dim), dtype=jnp.float32) / lr_mul
        b = jnp.zeros((out_dim,), dtype=jnp.float32)
        params.append((w, b))
    return params


def pack_params(raw_params, lr_mul=LR_MLP):
    """Fold EqualLinear scaling into the params and pack for the kernel:
         w0        = (W_0 * lr_mul/sqrt(32)).T            -> (32, 512)  bf16
         w_stacked = stack_{l=1..7} (W_l * lr_mul/sqrt(512)).T -> (7, 512, 512) bf16
         b_stacked = stack_{l=0..7} (b_l * lr_mul)         -> (8, 1, 512) f32
    """
    ws, bs = [], []
    for (w, b) in raw_params:
        out_dim, in_dim = w.shape
        scale = (1.0 / math.sqrt(in_dim)) * lr_mul
        ws.append(((w * scale).T).astype(jnp.bfloat16))               # (in_dim, out_dim)
        bs.append((b * lr_mul).reshape(1, STYLE_DIM).astype(jnp.float32))
    w0 = ws[0]                                                        # (32, 512) bf16
    w_stacked = jnp.stack(ws[1:], axis=0)                             # (7, 512, 512) bf16
    b_stacked = jnp.stack(bs, axis=0)                                 # (8, 1, 512) f32
    return w0, w_stacked, b_stacked


def e_watermark_reference(watermark_in, raw_params, lr_mul=LR_MLP):
    """Pure-JAX f32 reference of the exact PyTorch forward."""
    x = watermark_in
    for (w, b) in raw_params:
        scale = (1.0 / math.sqrt(w.shape[1])) * lr_mul
        y = x @ (w * scale).T + b * lr_mul
        x = jnp.where(y >= 0.0, y, NEG_SLOPE * y) * FLRELU_SCALE
    return x


def e_watermark_reference_packed(watermark_in, packed_params):
    """Pure-JAX replica of the kernel's own math (bf16 weights/activations,
    f32 accumulation) — tight correctness check for the Pallas kernel."""
    w0, w_stacked, b_stacked = packed_params
    x = watermark_in.astype(jnp.float32).astype(jnp.bfloat16)
    y = jnp.dot(x, w0, preferred_element_type=jnp.float32) + b_stacked[0]
    x = _fused_lrelu(y).astype(jnp.bfloat16)
    for l in range(1, N_MLP):
        y = jnp.dot(x, w_stacked[l - 1],
                    preferred_element_type=jnp.float32) + b_stacked[l]
        x = _fused_lrelu(y).astype(jnp.bfloat16)
    return x.astype(watermark_in.dtype)


if __name__ == "__main__":
    key = jax.random.PRNGKey(0)
    pkey, xkey = jax.random.split(key)

    raw_params = init_raw_params(pkey)
    packed_params = pack_params(raw_params)

    batch = 8
    watermark_in = jax.random.normal(xkey, (batch, WATERMARK_SIZE), dtype=jnp.float32)

    out = e_watermark_forward(watermark_in, packed_params)
    out = jax.block_until_ready(out)
    assert out.shape == (batch, STYLE_DIM)

    # Tight check: kernel vs a pure-JAX replica of the same bf16 math.
    ref_packed = e_watermark_reference_packed(watermark_in, packed_params)
    assert jnp.allclose(out, ref_packed, atol=2e-3, rtol=2e-3), \
        "mismatch vs bf16-matched reference"

    # Semantic check vs exact f32 PyTorch math (looser: weights stream as bf16).
    ref_exact = e_watermark_reference(watermark_in, raw_params)
    assert jnp.allclose(out, ref_exact, atol=1e-1, rtol=1e-1), \
        "mismatch vs f32 reference"

    print("KERNEL_OK")
</pallas_src>

<mosaic_0001>
module attributes {stable_mosaic.version = 11 : i64} {
  func.func @fused_mapping_kernel(%arg0: i32, %arg1: memref<8x32xf32, #tpu.memory_space<vmem>>, %arg2: memref<32x512xbf16, #tpu.memory_space<vmem>>, %arg3: memref<1x512x512xbf16, #tpu.memory_space<vmem>>, %arg4: memref<1x1x512xf32, #tpu.memory_space<vmem>>, %arg5: memref<8x512xf32, #tpu.memory_space<vmem>>, %arg6: memref<8x512xbf16, #tpu.memory_space<vmem>>) attributes {dimension_semantics = [#tpu.dimension_semantics<arbitrary>], iteration_bounds = array<i64: 8>, scalar_prefetch = 0 : i64, scratch_operands = 1 : i64, tpu.core_type = #tpu.core_type<tc>, window_params = [{pipeline_mode = #tpu.pipeline_mode<synchronous>, transform_indices = @transform_0, window_bounds = array<i64: 8, 32>}, {pipeline_mode = #tpu.pipeline_mode<synchronous>, transform_indices = @transform_1, window_bounds = array<i64: 32, 512>}, {transform_indices = @transform_2, window_bounds = array<i64: 1, 512, 512>}, {transform_indices = @transform_3, window_bounds = array<i64: 1, 1, 512>}, {pipeline_mode = #tpu.pipeline_mode<synchronous>, transform_indices = @transform_4, window_bounds = array<i64: 8, 512>}]} {
    %c0_i32 = arith.constant 0 : i32
    %0 = arith.cmpi eq, %arg0, %c0_i32 : i32
    %1 = arith.extui %0 : i1 to i32
    %c0_i32_0 = arith.constant 0 : i32
    %2 = arith.cmpi ne, %1, %c0_i32_0 : i32
    scf.if %2 {
      %c0 = arith.constant 0 : index
      %c0_4 = arith.constant 0 : index
      %9 = vector.load %arg1[%c0, %c0_4] : memref<8x32xf32, #tpu.memory_space<vmem>>, vector<8x32xf32>
      %10 = arith.truncf %9 : vector<8x32xf32> to vector<8x32xbf16>
      %c0_5 = arith.constant 0 : index
      %c0_6 = arith.constant 0 : index
      %11 = vector.load %arg2[%c0_5, %c0_6] : memref<32x512xbf16, #tpu.memory_space<vmem>>, vector<32x512xbf16>
      %cst = arith.constant dense<0.000000e+00> : vector<8x512xf32>
      %12 = tpu.matmul %10, %11, %cst {dimension_numbers = #tpu.dot_dimension_numbers<[1], [0], [0], [1], [0, 0, 1, 1], [], []>} : vector<8x32xbf16>, vector<32x512xbf16>, vector<8x512xf32> -> vector<8x512xf32>
      %c0_7 = arith.constant 0 : index
      %c0_8 = arith.constant 0 : index
      %c0_9 = arith.constant 0 : index
      %13 = vector.load %arg4[%c0_7, %c0_8, %c0_9] : memref<1x1x512xf32, #tpu.memory_space<vmem>>, vector<1x1x512xf32>
      %14 = vector.shape_cast %13 : vector<1x1x512xf32> to vector<1x512xf32>
      %15 = vector.broadcast %14 : vector<1x512xf32> to vector<8x512xf32>
      %16 = arith.addf %12, %15 : vector<8x512xf32>
      %cst_10 = arith.constant 0.000000e+00 : f32
      %17 = vector.broadcast %cst_10 : f32 to vector<8x512xf32>
      %18 = arith.cmpf oge, %16, %17 : vector<8x512xf32>
      %cst_11 = arith.constant 2.000000e-01 : f32
      %19 = vector.broadcast %cst_11 : f32 to vector<8x512xf32>
      %20 = arith.mulf %19, %16 : vector<8x512xf32>
      %21 = arith.select %18, %16, %20 : vector<8x512xi1>, vector<8x512xf32>
      %cst_12 = arith.constant 1.41421354 : f32
      %22 = vector.broadcast %cst_12 : f32 to vector<8x512xf32>
      %23 = arith.mulf %21, %22 : vector<8x512xf32>
      %24 = arith.truncf %23 : vector<8x512xf32> to vector<8x512xbf16>
      %c0_13 = arith.constant 0 : index
      %c0_14 = arith.constant 0 : index
      %25 = vector.load %arg6[%c0_13, %c0_14] : memref<8x512xbf16, #tpu.memory_space<vmem>>, vector<8x512xbf16>
      tpu.vector_store %arg6[%c0_13, %c0_14], %24 {strides = array<i32>} : memref<8x512xbf16, #tpu.memory_space<vmem>>, vector<8x512xbf16>,
    } else {
    }
    %c0_i32_1 = arith.constant 0 : i32
    %3 = arith.cmpi sgt, %arg0, %c0_i32_1 : i32
    %4 = arith.extui %3 : i1 to i32
    %c0_i32_2 = arith.constant 0 : i32
    %5 = arith.cmpi ne, %4, %c0_i32_2 : i32
    scf.if %5 {
      %c0 = arith.constant 0 : index
      %c0_4 = arith.constant 0 : index
      %9 = vector.load %arg6[%c0, %c0_4] : memref<8x512xbf16, #tpu.memory_space<vmem>>, vector<8x512xbf16>
      %c0_5 = arith.constant 0 : index
      %c0_6 = arith.constant 0 : index
      %c0_7 = arith.constant 0 : index
      %10 = vector.load %arg3[%c0_5, %c0_6, %c0_7] : memref<1x512x512xbf16, #tpu.memory_space<vmem>>, vector<1x512x512xbf16>
      %11 = vector.shape_cast %10 : vector<1x512x512xbf16> to vector<512x512xbf16>
      %cst = arith.constant dense<0.000000e+00> : vector<8x512xf32>
      %12 = tpu.matmul %9, %11, %cst {dimension_numbers = #tpu.dot_dimension_numbers<[1], [0], [0], [1], [0, 0, 1, 1], [], []>} : vector<8x512xbf16>, vector<512x512xbf16>, vector<8x512xf32> -> vector<8x512xf32>
      %c0_8 = arith.constant 0 : index
      %c0_9 = arith.constant 0 : index
      %c0_10 = arith.constant 0 : index
      %13 = vector.load %arg4[%c0_8, %c0_9, %c0_10] : memref<1x1x512xf32, #tpu.memory_space<vmem>>, vector<1x1x512xf32>
      %14 = vector.shape_cast %13 : vector<1x1x512xf32> to vector<1x512xf32>
      %15 = vector.broadcast %14 : vector<1x512xf32> to vector<8x512xf32>
      %16 = arith.addf %12, %15 : vector<8x512xf32>
      %cst_11 = arith.constant 0.000000e+00 : f32
      %17 = vector.broadcast %cst_11 : f32 to vector<8x512xf32>
      %18 = arith.cmpf oge, %16, %17 : vector<8x512xf32>
      %cst_12 = arith.constant 2.000000e-01 : f32
      %19 = vector.broadcast %cst_12 : f32 to vector<8x512xf32>
      %20 = arith.mulf %19, %16 : vector<8x512xf32>
      %21 = arith.select %18, %16, %20 : vector<8x512xi1>, vector<8x512xf32>
      %cst_13 = arith.constant 1.41421354 : f32
      %22 = vector.broadcast %cst_13 : f32 to vector<8x512xf32>
      %23 = arith.mulf %21, %22 : vector<8x512xf32>
      %24 = arith.truncf %23 : vector<8x512xf32> to vector<8x512xbf16>
      %c0_14 = arith.constant 0 : index
      %c0_15 = arith.constant 0 : index
      %25 = vector.load %arg6[%c0_14, %c0_15] : memref<8x512xbf16, #tpu.memory_space<vmem>>, vector<8x512xbf16>
      tpu.vector_store %arg6[%c0_14, %c0_15], %24 {strides = array<i32>} : memref<8x512xbf16, #tpu.memory_space<vmem>>, vector<8x512xbf16>,
    } else {
    }
    %c7_i32 = arith.constant 7 : i32
    %6 = arith.cmpi eq, %arg0, %c7_i32 : i32
    %7 = arith.extui %6 : i1 to i32
    %c0_i32_3 = arith.constant 0 : i32
    %8 = arith.cmpi ne, %7, %c0_i32_3 : i32
    scf.if %8 {
      %c0 = arith.constant 0 : index
      %c0_4 = arith.constant 0 : index
      %9 = vector.load %arg6[%c0, %c0_4] : memref<8x512xbf16, #tpu.memory_space<vmem>>, vector<8x512xbf16>
      %10 = arith.extf %9 : vector<8x512xbf16> to vector<8x512xf32>
      %c0_5 = arith.constant 0 : index
      %c0_6 = arith.constant 0 : index
      %11 = vector.load %arg5[%c0_5, %c0_6] : memref<8x512xf32, #tpu.memory_space<vmem>>, vector<8x512xf32>
      tpu.vector_store %arg5[%c0_5, %c0_6], %10 {strides = array<i32>} : memref<8x512xf32, #tpu.memory_space<vmem>>, vector<8x512xf32>,
    } else {
    }
    return
  }
  func.func @transform_0(%arg0: i32) -> (i32, i32) {
    %c0_i32 = arith.constant 0 : i32
    %c0_i32_0 = arith.constant 0 : i32
    %c0_i32_1 = arith.constant 0 : i32
    return %c0_i32, %c0_i32_0 : i32, i32
  }
  func.func @transform_1(%arg0: i32) -> (i32, i32) {
    %c0_i32 = arith.constant 0 : i32
    %c0_i32_0 = arith.constant 0 : i32
    %c0_i32_1 = arith.constant 0 : i32
    return %c0_i32, %c0_i32_0 : i32, i32
  }
  func.func @transform_2(%arg0: i32) -> (i32, i32, i32) {
    %c1_i32 = arith.constant 1 : i32
    %0 = arith.subi %arg0, %c1_i32 : i32
    %c0_i32 = arith.constant 0 : i32
    %1 = arith.maxsi %0, %c0_i32 : i32
    %c0_i32_0 = arith.constant 0 : i32
    %c0_i32_1 = arith.constant 0 : i32
    %c0_i32_2 = arith.constant 0 : i32
    return %1, %c0_i32_0, %c0_i32_1 : i32, i32, i32
  }
  func.func @transform_3(%arg0: i32) -> (i32, i32, i32) {
    %c0_i32 = arith.constant 0 : i32
    %c0_i32_0 = arith.constant 0 : i32
    %c0_i32_1 = arith.constant 0 : i32
    return %arg0, %c0_i32, %c0_i32_0 : i32, i32, i32
  }
  func.func @transform_4(%arg0: i32) -> (i32, i32) {
    %c0_i32 = arith.constant 0 : i32
    %c0_i32_0 = arith.constant 0 : i32
    %c0_i32_1 = arith.constant 0 : i32
    return %c0_i32, %c0_i32_0 : i32, i32
  }
}

</mosaic_0001>

<llo_original>
// kernel: tpu_custom_call.1
$region0: #{tpu_custom_call.1}
  #allocation0 [shape = 'u32[]', space=smem, size = 0x4, offset = 0x4, fixed_abs, tag = 'smem constant byte address 0x4 - core index']
  #allocation1 [shape = 'u32[144,128]{1,0:T(1,128)}', space=vmem, size = 0x12000, scoped, tag = 'internal scratch']
  #allocation2 [shape = 'bf16[8,512]{1,0:T(8,128)(2,1)}', space=vmem, size = 0x2000, scoped, tag = 'scratch operand']
  %s0 = inlined_call_operand.hbm [shape: f32[8,32], index: 0, kind: input, shape index: {}]
  %s1 = inlined_call_operand.hbm [shape: bf16[32,512], index: 1, kind: input, shape index: {}]
  %s2 = inlined_call_operand.hbm [shape: bf16[7,512,512], index: 2, kind: input, shape index: {}]
  %s3 = inlined_call_operand.hbm [shape: f32[8,1,512], index: 3, kind: input, shape index: {}]
  %s4 = inlined_call_operand.hbm [shape: f32[8,512], index: 4, kind: output, shape index: {}]
  %s5 = sld [smem:[#allocation0]]
  $region77: #{tpu_custom_call.1} parent=0
    _
  %s7 = ssub.s32 1, %s5
  %s8 = scalar_select 0, %s7, %s5
  $region1: #{tpu_custom_call.1} parent=0
    #allocation3 [shape = 'u8[4096]{0}', space=vmem, size = 0x1000, scoped, tag = 'input window, operand 0, single buffered']
    #allocation4 [shape = 's32[2]{0}', space=sflag, size = 0x8, scoped, tag = 'scoped memory for tpu_custom_call.1']
    #allocation5 [shape = 's32[2]{0}', space=sflag, size = 0x8, scoped, tag = 'scoped memory for tpu_custom_call.1']
    #allocation6 [shape = 'u8[32768]{0}', space=vmem, size = 0x8000, scoped, tag = 'input window, operand 1, single buffered']
    #allocation7 [shape = 's32[1]{0}', space=sflag, size = 0x4, scoped, tag = 'scoped memory for tpu_custom_call.1']
    #allocation8 [shape = 'u8[1048576]{0}', space=vmem, size = 0x100000, scoped, tag = 'input window, operand 2']
    #allocation9 [shape = 'u8[4096]{0}', space=vmem, size = 0x1000, scoped, tag = 'input window, operand 3']
    #allocation10 [shape = 'u8[16384]{0}', space=vmem, size = 0x4000, scoped, tag = 'output window, operand 0, single buffered']
    %9 = vsyncpa [#allocation4], 0
    %10 = vsyncpa [#allocation7], 0
    %11 = vsyncpa [#allocation5], 0
    loop: start=0, step=1, limit=10
    $region2: #{tpu_custom_call.1} parent=1 // loop_pre_header
      _
    $region3: #{tpu_custom_call.1} parent=1 // loop_header
      %s13 = sphi 0, %s17
      %p14 = scmp.ge.s32.totalorder %s13, 10
      %s21 = sphi 0, %s21
      %s23 = sphi 0, %s21
      %s24 = sphi 0, %s23
      %s38 = sphi 0, %s24
      %s42 = sphi 0, %s42
      %s44 = sphi 0, %s42
      %s45 = sphi 0, %s44
      %s59 = sphi 0, %s45
      %s71 = sphi 0, %s73
      %s74 = sphi 0, %s71
      %s75 = sphi 0, %s74
      %s91 = sphi 0, %s75
      %s97 = sphi 0, %s99
      %s100 = sphi 0, %s97
      %s101 = sphi 0, %s100
      %s117 = sphi 0, %s101
      %s121 = sphi 0, %s121
      %s123 = sphi 0, %s121
      %s124 = sphi 0, %s123
      %s138 = sphi 0, %s124
    $region4: #{tpu_custom_call.1} parent=1 // loop_header_branch
      %16 = sbr.rel (%p14) target = $region8
    $region5: #{tpu_custom_call.1} parent=1 // loop_body
      %s18 = ssub.s32 %s13, 1
      %s19 = ssub.s32 %s13, 2
      %s20 = sadd.s32 %s13, 1
      %s22 = sadd.s32 %s21, 1
      %p25 = scmp.eq.s32.totalorder %s13, 7
      %p26 = scmp.ne.s32.totalorder %s21, %s23
      %p27 = scmp.eq.s32.totalorder %s13, 0
      %p28 = por %p26, %p27
      %p29 = scmp.ne.s32.totalorder %s21, %s23
      %p30 = scmp.eq.s32.totalorder %s18, 7
      %p31 = por %p29, %p30
      %p32 = scmp.ne.s32.totalorder %s23, %s24
      %p33 = scmp.eq.s32.totalorder %s18, 0
      %p34 = por %p32, %p33
      %p35 = scmp.ne.s32.totalorder %s23, %s24
      %p36 = scmp.eq.s32.totalorder %s19, 7
      %p37 = por %p35, %p36
      %p39 = scmp.ne.s32.totalorder %s24, %s38
      %p40 = scmp.eq.s32.totalorder %s19, 0
      %p41 = por %p39, %p40
      %s43 = sadd.s32 %s42, 1
      %p46 = scmp.eq.s32.totalorder %s13, 7
      %p47 = scmp.ne.s32.totalorder %s42, %s44
      %p48 = scmp.eq.s32.totalorder %s13, 0
      %p49 = por %p47, %p48
      %p50 = scmp.ne.s32.totalorder %s42, %s44
      %p51 = scmp.eq.s32.totalorder %s18, 7
      %p52 = por %p50, %p51
      %p53 = scmp.ne.s32.totalorder %s44, %s45
      %p54 = scmp.eq.s32.totalorder %s18, 0
      %p55 = por %p53, %p54
      %p56 = scmp.ne.s32.totalorder %s44, %s45
      %p57 = scmp.eq.s32.totalorder %s19, 7
      %p58 = por %p56, %p57
      %p60 = scmp.ne.s32.totalorder %s45, %s59
      %p61 = scmp.eq.s32.totalorder %s19, 0
      %p62 = por %p60, %p61
      %s63 = ssub.s32 %s13, 1
      %p64 = scmp.gt.s32.totalorder %s63, 0
      %s65 = scalar_select %p64, %s63, 0
      %s66 = ssub.s32 %s20, 1
      %p67 = scmp.gt.s32.totalorder %s66, 0
      %s68 = scalar_select %p67, %s66, 0
      %s69 = ssub.s32 %s65, %s68
      %p70 = scmp.eq.s32.totalorder %s69, 0
      %s72 = sadd.s32 %s71, 1
      %s73 = scalar_select %p70, %s71, %s72
      %p76 = pneg %p70
      %p77 = scmp.eq.s32.totalorder %s13, 7
      %p78 = por %p76, %p77
      %p79 = scmp.ne.s32.totalorder %s71, %s74
      %p80 = scmp.eq.s32.totalorder %s13, 0
      %p81 = por %p79, %p80
      %p82 = scmp.ne.s32.totalorder %s71, %s74
      %p83 = scmp.eq.s32.totalorder %s18, 7
      %p84 = por %p82, %p83
      %p85 = scmp.ne.s32.totalorder %s74, %s75
      %p86 = scmp.eq.s32.totalorder %s18, 0
      %p87 = por %p85, %p86
      %p88 = scmp.ne.s32.totalorder %s74, %s75
      %p89 = scmp.eq.s32.totalorder %s19, 7
      %p90 = por %p88, %p89
      %p92 = scmp.ne.s32.totalorder %s75, %s91
      %p93 = scmp.eq.s32.totalorder %s19, 0
      %p94 = por %p92, %p93
      %s95 = ssub.s32 %s13, %s20
      %p96 = scmp.eq.s32.totalorder %s95, 0
      %s98 = sadd.s32 %s97, 1
      %s99 = scalar_select %p96, %s97, %s98
      %p102 = pneg %p96
      %p103 = scmp.eq.s32.totalorder %s13, 7
      %p104 = por %p102, %p103
      %p105 = scmp.ne.s32.totalorder %s97, %s100
      %p106 = scmp.eq.s32.totalorder %s13, 0
      %p107 = por %p105, %p106
      %p108 = scmp.ne.s32.totalorder %s97, %s100
      %p109 = scmp.eq.s32.totalorder %s18, 7
      %p110 = por %p108, %p109
      %p111 = scmp.ne.s32.totalorder %s100, %s101
      %p112 = scmp.eq.s32.totalorder %s18, 0
      %p113 = por %p111, %p112
      %p114 = scmp.ne.s32.totalorder %s100, %s101
      %p115 = scmp.eq.s32.totalorder %s19, 7
      %p116 = por %p114, %p115
      %p118 = scmp.ne.s32.totalorder %s101, %s117
      %p119 = scmp.eq.s32.totalorder %s19, 0
      %p120 = por %p118, %p119
      %s122 = sadd.s32 %s121, 1
      %p125 = scmp.eq.s32.totalorder %s13, 7
      %p126 = scmp.ne.s32.totalorder %s121, %s123
      %p127 = scmp.eq.s32.totalorder %s13, 0
      %p128 = por %p126, %p127
      %p129 = scmp.ne.s32.totalorder %s121, %s123
      %p130 = scmp.eq.s32.totalorder %s18, 7
      %p131 = por %p129, %p130
      %p132 = scmp.ne.s32.totalorder %s123, %s124
      %p133 = scmp.eq.s32.totalorder %s18, 0
      %p134 = por %p132, %p133
      %p135 = scmp.ne.s32.totalorder %s123, %s124
      %p136 = scmp.eq.s32.totalorder %s19, 7
      %p137 = por %p135, %p136
      %p139 = scmp.ne.s32.totalorder %s124, %s138
      %p140 = scmp.eq.s32.totalorder %s19, 0
      %p141 = por %p139, %p140
      %p142 = scmp.le.s32.totalorder 1, %s13
      %p143 = scmp.lt.s32.totalorder %s13, 9
      %p144 = pnand %p142, %p143
      %p145 = pneg %p144
      // Predicated region
      $region9: #{tpu_custom_call.1} parent=5 // pred_check
        _
      $region10: #{tpu_custom_call.1} parent=5 // pred_check_branch
        %147 = sbr.rel (%p144) target = $region12
      $region11: #{tpu_custom_call.1} parent=5 // pred_region
        %s148 = ssub.s32 %s13, 1
        // Predicated region
        $region13: #{tpu_custom_call.1} parent=11 // pred_check
          %p149 = pneg %p34
        $region14: #{tpu_custom_call.1} parent=11 // pred_check_branch
          %151 = sbr.rel (%p149) target = $region16
        $region15: #{tpu_custom_call.1} parent=11 // pred_region
          %s153 = ssub.s32 128, 128
          %154 = vsyncadd [#allocation4], %s153
          %s156 = sshll.u32 [#allocation3], 4
          %s157 = int_to_ptr.vmem [resolvable:$true] %s156
          %159 = dma.hbm_to_vmem [thread:$0]  %s0, 128, %s157, [#allocation4]
        $region16: #{tpu_custom_call.1} parent=11 // pred_fallthru
          _
        // Predicated region
        $region17: #{tpu_custom_call.1} parent=11 // pred_check
          %p160 = pneg %p55
        $region18: #{tpu_custom_call.1} parent=11 // pred_check_branch
          %162 = sbr.rel (%p160) target = $region20
        $region19: #{tpu_custom_call.1} parent=11 // pred_region
          %s164 = ssub.s32 1024, 1024
          %165 = vsyncadd [#allocation7], %s164
          %s166 = sshll.u32 [#allocation6], 4
          %s167 = int_to_ptr.vmem [resolvable:$true] %s166
          %172 = dma.hbm_to_vmem [thread:$0]  %s1, 1024, %s167, [#allocation7], 256, 256, 16
        $region20: #{tpu_custom_call.1} parent=11 // pred_fallthru
          _
      $region12: #{tpu_custom_call.1} parent=5 // pred_fallthru
        _
      %p173 = scmp.lt.s32.totalorder %s13, 8
      // Predicated region
      $region21: #{tpu_custom_call.1} parent=5 // pred_check
        %p174 = pneg %p173
      $region22: #{tpu_custom_call.1} parent=5 // pred_check_branch
        %176 = sbr.rel (%p174) target = $region24
      $region23: #{tpu_custom_call.1} parent=5 // pred_region
        // Predicated region
        $region25: #{tpu_custom_call.1} parent=23 // pred_check
          %p177 = pneg %p81
        $region26: #{tpu_custom_call.1} parent=23 // pred_check_branch
          %179 = sbr.rel (%p177) target = $region28
        $region27: #{tpu_custom_call.1} parent=23 // pred_region
          %s180 = sand.u32 %s13, 1
          %s181 = scalar_lea.sflag [#allocation4], %s180
          %s182 = sand.u32 %s71, 1
          %s183 = smul.addr %s182, 1024
          %s184 = scalar_lea.vmem [#allocation8], %s183
          %s185 = ssub.s32 %s13, 1
          %p186 = scmp.gt.s32.totalorder %s185, 0
          %s187 = scalar_select %p186, %s185, 0
          %s189 = ssub.s32 16384, 16384
          %190 = vsyncadd %s181, %s189
          %s191 = smul.addr %s187, 256
          %s192 = smul.addr %s191, 64
          %s193 = scalar_lea.hbm %s2, %s192
          %s194 = sshll.u32 %s184, 4
          %s195 = int_to_ptr.vmem [resolvable:$true] %s194
          %200 = dma.hbm_to_vmem [thread:$0]  %s193, 16384, %s195, %s181, 256, 256, 16
        $region28: #{tpu_custom_call.1} parent=23 // pred_fallthru
          _
        // Predicated region
        $region29: #{tpu_custom_call.1} parent=23 // pred_check
          %p201 = pneg %p107
        $region30: #{tpu_custom_call.1} parent=23 // pred_check_branch
          %203 = sbr.rel (%p201) target = $region32
        $region31: #{tpu_custom_call.1} parent=23 // pred_region
          %s204 = sand.u32 %s13, 1
          %s205 = scalar_lea.sflag [#allocation4], %s204
          %s206 = sand.u32 %s97, 1
          %s207 = smul.addr %s206, 4
          %s208 = scalar_lea.vmem [#allocation9], %s207
          %s210 = ssub.s32 64, 64
          %211 = vsyncadd %s205, %s210
          %s212 = smul.addr %s13, 4
          %s213 = smul.addr %s212, 16
          %s214 = scalar_lea.hbm %s3, %s213
          %s216 = sshll.u32 %s208, 4
          %s217 = int_to_ptr.vmem [resolvable:$true] %s216
          %219 = dma.hbm_to_vmem [thread:$0]  %s214, 64, %s217, %s205
        $region32: #{tpu_custom_call.1} parent=23 // pred_fallthru
          _
      $region24: #{tpu_custom_call.1} parent=5 // pred_fallthru
        _
      %p220 = scmp.le.s32.totalorder 1, %s13
      %p221 = scmp.lt.s32.totalorder %s13, 9
      %p222 = pnand %p220, %p221
      %p223 = pneg %p222
      // Predicated region
      $region33: #{tpu_custom_call.1} parent=5 // pred_check
        _
      $region34: #{tpu_custom_call.1} parent=5 // pred_check_branch
        %225 = sbr.rel (%p222) target = $region36
      $region35: #{tpu_custom_call.1} parent=5 // pred_region
        %s226 = ssub.s32 %s13, 1
        // Predicated region
        $region37: #{tpu_custom_call.1} parent=35 // pred_check
          %p227 = pneg %p34
        $region38: #{tpu_custom_call.1} parent=35 // pred_check_branch
          %229 = sbr.rel (%p227) target = $region40
        $region39: #{tpu_custom_call.1} parent=35 // pred_region
          %230 = dma.done [#allocation4], 128
        $region40: #{tpu_custom_call.1} parent=35 // pred_fallthru
          _
        // Predicated region
        $region41: #{tpu_custom_call.1} parent=35 // pred_check
          %p231 = pneg %p55
        $region42: #{tpu_custom_call.1} parent=35 // pred_check_branch
          %233 = sbr.rel (%p231) target = $region44
        $region43: #{tpu_custom_call.1} parent=35 // pred_region
          %234 = dma.done [#allocation7], 1024
        $region44: #{tpu_custom_call.1} parent=35 // pred_fallthru
          _
        %s235 = sand.u32 %s18, 1
        %s236 = scalar_lea.sflag [#allocation4], %s235
        %s237 = sand.u32 %s74, 1
        %s238 = smul.addr %s237, 1024
        %s239 = scalar_lea.vmem [#allocation8], %s238
        // Predicated region
        $region45: #{tpu_custom_call.1} parent=35 // pred_check
          %p240 = pneg %p87
        $region46: #{tpu_custom_call.1} parent=35 // pred_check_branch
          %242 = sbr.rel (%p240) target = $region48
        $region47: #{tpu_custom_call.1} parent=35 // pred_region
          %243 = dma.done %s236, 16384
        $region48: #{tpu_custom_call.1} parent=35 // pred_fallthru
          _
        %s244 = sand.u32 %s18, 1
        %s245 = scalar_lea.sflag [#allocation4], %s244
        %s246 = sand.u32 %s100, 1
        %s247 = smul.addr %s246, 4
        %s248 = scalar_lea.vmem [#allocation9], %s247
        // Predicated region
        $region49: #{tpu_custom_call.1} parent=35 // pred_check
          %p249 = pneg %p113
        $region50: #{tpu_custom_call.1} parent=35 // pred_check_branch
          %251 = sbr.rel (%p249) target = $region52
        $region51: #{tpu_custom_call.1} parent=35 // pred_region
          %252 = dma.done %s245, 64
        $region52: #{tpu_custom_call.1} parent=35 // pred_fallthru
          _
        %p253 = pneg %p34
        %p254 = pneg %p31
        %p255 = pneg %p55
        %p256 = pneg %p52
        %s257 = sand.u32 %s18, 1
        %s258 = scalar_lea.sflag [#allocation4], %s257
        %s259 = sand.u32 %s74, 1
        %s260 = smul.addr %s259, 1024
        %s261 = scalar_lea.vmem [#allocation8], %s260
        %p262 = pneg %p87
        %p263 = pneg %p84
        %s264 = sand.u32 %s18, 1
        %s265 = scalar_lea.sflag [#allocation4], %s264
        %s266 = sand.u32 %s100, 1
        %s267 = smul.addr %s266, 4
        %s268 = scalar_lea.vmem [#allocation9], %s267
        %p269 = pneg %p113
        %p270 = pneg %p110
        %p271 = pneg %p134
        %p272 = pneg %p131
        %s273 = ssub.s32 %s18, 1
        %p274 = scmp.gt.s32.totalorder %s273, 0
        %s275 = scalar_select %p274, %s273, 0
        %p277 = scmp.eq.s32.totalorder %s18, 0
        // Predicated region
        $region53: #{tpu_custom_call.1} parent=35 // pred_check
          %p278 = pneg %p277
        $region54: #{tpu_custom_call.1} parent=35 // pred_check_branch
          %280 = sbr.rel (%p278) target = $region56
        $region55: #{tpu_custom_call.1} parent=35 // pred_region
          %v281 = vld [vmem:[#allocation3] sm:$0xff]
          %v282 = vpack.c.bf16 %v281, %v281
          %v283 = vld [vmem:[#allocation6] sm:$0xff]
          %v284 = vld [vmem:[#allocation6 + $0x8] sm:$0xff]
          %v285 = vld [vmem:[#allocation6 + $0x10] sm:$0xff]
          %v286 = vld [vmem:[#allocation6 + $0x18] sm:$0xff]
          %v287 = vld [vmem:[#allocation6 + $0x20] sm:$0xff]
          %v288 = vld [vmem:[#allocation6 + $0x28] sm:$0xff]
          %v289 = vld [vmem:[#allocation6 + $0x30] sm:$0xff]
          %v290 = vld [vmem:[#allocation6 + $0x38] sm:$0xff]
          %v291 = vld [vmem:[%s248] sm:$0xf]
          %v293 = vlaneseq
          %v294 = vshrl.u32 %v293, 7
          %v295 = vsub.s32 0, %v294
          %v296 = vrot.slane %v291, %v295
          %v297 = vlaneseq
          %v298 = vshrl.u32 %v297, 7
          %v299 = vsub.s32 1, %v298
          %v300 = vrot.slane %v291, %v299
          %v301 = vlaneseq
          %v302 = vshrl.u32 %v301, 7
          %v303 = vsub.s32 2, %v302
          %v304 = vrot.slane %v291, %v303
          %v305 = vlaneseq
          %v306 = vshrl.u32 %v305, 7
          %v307 = vsub.s32 3, %v306
          %v308 = vrot.slane %v291, %v307
          %v321 = vunpack.c.l.b16 %v283
          %v322 = vunpack.c.h.b16 %v283
          %v323 = vunpack.c.l.b16 %v284
          %v324 = vunpack.c.h.b16 %v284
          %v325 = vunpack.c.l.b16 %v285
          %v326 = vunpack.c.h.b16 %v285
          %v327 = vunpack.c.l.b16 %v286
          %v328 = vunpack.c.h.b16 %v286
          %v329 = vunpack.c.l.b16 %v287
          %v330 = vunpack.c.h.b16 %v287
          %v331 = vunpack.c.l.b16 %v288
          %v332 = vunpack.c.h.b16 %v288
          %v333 = vunpack.c.l.b16 %v289
          %v334 = vunpack.c.h.b16 %v289
          %v335 = vunpack.c.l.b16 %v290
          %v336 = vunpack.c.h.b16 %v290
          %v337 = vpack.c.b16 %v325, %v321
          %v338 = vpack.c.b16 %v326, %v322
          %v339 = vpack.c.b16 %v327, %v323
          %v340 = vpack.c.b16 %v328, %v324
          %v341 = vpack.c.b16 %v333, %v329
          %v342 = vpack.c.b16 %v334, %v330
          %v343 = vpack.c.b16 %v335, %v331
          %v344 = vpack.c.b16 %v336, %v332
          %vm353 = vcmask 261120
          %v355 = vsel %vm353, %v282, 0
          %357 = vmatprep.subr.bf16.mxu0 %v338
          %358 = vmatpush1.bf16.msra.mxu0 %v337
          %359 = vmatprep.subr.bf16.mxu0 %v342
          %360 = vmatpush1.bf16.msra.mxu0 %v341
          %361 = vmatprep.subr.bf16.mxu0 0
          %362 = vmatpush1.bf16.msra.mxu0 0
          %363 = vmatprep.subr.bf16.mxu0 0
          %364 = vmatpush1.bf16.msra.mxu0 0
          %365 = vmatprep.subr.bf16.mxu0 0
          %366 = vmatpush1.bf16.msra.mxu0 0
          %367 = vmatprep.subr.bf16.mxu0 0
          %368 = vmatpush1.bf16.msra.mxu0 0
          %369 = vmatprep.subr.bf16.mxu0 0
          %370 = vmatpush1.bf16.msra.mxu0 0
          %371 = vmatprep.subr.bf16.mxu0 0
          %372 = vmatpush1.bf16.msra.mxu0 0
          %373 = vmatprep.subr.bf16.mxu0 0
          %374 = vmatpush1.bf16.msra.mxu0 0
          %375 = vmatprep.subr.bf16.mxu0 0
          %376 = vmatpush1.bf16.msra.mxu0 0
          %377 = vmatprep.subr.bf16.mxu0 0
          %378 = vmatpush1.bf16.msra.mxu0 0
          %379 = vmatprep.subr.bf16.mxu0 0
          %380 = vmatpush1.bf16.msra.mxu0 0
          %381 = vmatprep.subr.bf16.mxu0 0
          %382 = vmatpush1.bf16.msra.mxu0 0
          %383 = vmatprep.subr.bf16.mxu0 0
          %384 = vmatpush1.bf16.msra.mxu0 0
          %385 = vmatprep.subr.bf16.mxu0 0
          %386 = vmatpush1.bf16.msra.mxu0 0
          %387 = vmatprep.subr.bf16.mxu0 0
          %388 = vmatpush1.bf16.msra.mxu0 0
          %389 = vmatprep.mubr.bf16.mxu0 0
          %390 = vmatmul.mubr.bf16.gmra.mrb[0].mxu0 %v355
          %v391 = vpop.f32.mrb[0].mxu0
          %v392 = vadd.f32 %v296, %v391
          %v393 = vpop.f32.mrb[0].mxu0
          %v394 = vadd.f32 %v300, %v393
          %v395 = vpop.f32.mrb[0].mxu0
          %v396 = vpop.f32.mrb[0].mxu0
          %397 = vdwg.mxu0
          %398 = vmatprep.subr.bf16.mxu0 %v340
          %399 = vmatpush1.bf16.msra.mxu0 %v339
          %400 = vmatprep.subr.bf16.mxu0 %v344
          %401 = vmatpush1.bf16.msra.mxu0 %v343
          %402 = vmatprep.subr.bf16.mxu0 0
          %403 = vmatpush1.bf16.msra.mxu0 0
          %404 = vmatprep.subr.bf16.mxu0 0
          %405 = vmatpush1.bf16.msra.mxu0 0
          %406 = vmatprep.subr.bf16.mxu0 0
          %407 = vmatpush1.bf16.msra.mxu0 0
          %408 = vmatprep.subr.bf16.mxu0 0
          %409 = vmatpush1.bf16.msra.mxu0 0
          %410 = vmatprep.subr.bf16.mxu0 0
          %411 = vmatpush1.bf16.msra.mxu0 0
          %412 = vmatprep.subr.bf16.mxu0 0
          %413 = vmatpush1.bf16.msra.mxu0 0
          %414 = vmatprep.subr.bf16.mxu0 0
          %415 = vmatpush1.bf16.msra.mxu0 0
          %416 = vmatprep.subr.bf16.mxu0 0
          %417 = vmatpush1.bf16.msra.mxu0 0
          %418 = vmatprep.subr.bf16.mxu0 0
          %419 = vmatpush1.bf16.msra.mxu0 0
          %420 = vmatprep.subr.bf16.mxu0 0
          %421 = vmatpush1.bf16.msra.mxu0 0
          %422 = vmatprep.subr.bf16.mxu0 0
          %423 = vmatpush1.bf16.msra.mxu0 0
          %424 = vmatprep.subr.bf16.mxu0 0
          %425 = vmatpush1.bf16.msra.mxu0 0
          %426 = vmatprep.subr.bf16.mxu0 0
          %427 = vmatpush1.bf16.msra.mxu0 0
          %428 = vmatprep.subr.bf16.mxu0 0
          %429 = vmatpush1.bf16.msra.mxu0 0
          %430 = vmatprep.mubr.bf16.mxu0 0
          %431 = vmatmul.mubr.bf16.gmra.mrb[0].mxu0 %v355
          %v432 = vpop.f32.mrb[0].mxu0
          %v433 = vadd.f32 %v304, %v432
          %v434 = vpop.f32.mrb[0].mxu0
          %v435 = vadd.f32 %v308, %v434
          %v436 = vpop.f32.mrb[0].mxu0
          %v437 = vpop.f32.mrb[0].mxu0
          %438 = vdwg.mxu0
          %vm439 = vcmp.ge.f32.partialorder %v392, 0.0
          %vm440 = vcmp.ge.f32.partialorder %v394, 0.0
          %vm441 = vcmp.ge.f32.partialorder %v433, 0.0
          %vm442 = vcmp.ge.f32.partialorder %v435, 0.0
          %v443 = vmul.f32 %v392, 0.2
          %v444 = vmul.f32 %v394, 0.2
          %v445 = vmul.f32 %v433, 0.2
          %v446 = vmul.f32 %v435, 0.2
          %v447 = vsel %vm439, %v392, %v443
          %v448 = vsel %vm440, %v394, %v444
          %v449 = vsel %vm441, %v433, %v445
          %v450 = vsel %vm442, %v435, %v446
          %v451 = vmul.f32 %v447, 1.4142135
          %v452 = vmul.f32 %v448, 1.4142135
          %v453 = vmul.f32 %v449, 1.4142135
          %v454 = vmul.f32 %v450, 1.4142135
          %v455 = vpack.c.bf16 %v451, %v451
          %v456 = vpack.c.bf16 %v452, %v452
          %v457 = vpack.c.bf16 %v453, %v453
          %v458 = vpack.c.bf16 %v454, %v454
          %v463 = vunpack.c.l.b16 %v455
          %v464 = vunpack.c.l.b16 %v456
          %v465 = vunpack.c.l.b16 %v457
          %v466 = vunpack.c.l.b16 %v458
          %v467 = vpack.c.b16 %v464, %v463
          %v468 = vpack.c.b16 %v466, %v465
          %471 = vst [vmem:[#allocation2] sm:$0xff] %v467
          %472 = vst [vmem:[#allocation2 + $0x8] sm:$0xff] %v468
        $region56: #{tpu_custom_call.1} parent=35 // pred_fallthru
          _
        %p473 = scmp.gt.s32.totalorder %s18, 0
        // Predicated region
        $region57: #{tpu_custom_call.1} parent=35 // pred_check
          %p474 = pneg %p473
        $region58: #{tpu_custom_call.1} parent=35 // pred_check_branch
          %476 = sbr.rel (%p474) target = $region60
        $region59: #{tpu_custom_call.1} parent=35 // pred_region
          %v477 = vld [vmem:[#allocation2] sm:$0xff]
          %v478 = vld [vmem:[#allocation2 + $0x8] sm:$0xff]
          %v479 = vld [vmem:[%s239] sm:$0xff]
          %v480 = vld [vmem:[%s239 + $0x8] sm:$0xff]
          %v481 = vld [vmem:[%s239 + $0x10] sm:$0xff]
          %v482 = vld [vmem:[%s239 + $0x18] sm:$0xff]
          %v483 = vld [vmem:[%s239 + $0x20] sm:$0xff]
          %v484 = vld [vmem:[%s239 + $0x28] sm:$0xff]
          %v485 = vld [vmem:[%s239 + $0x30] sm:$0xff]
          %v486 = vld [vmem:[%s239 + $0x38] sm:$0xff]
          %v487 = vld [vmem:[%s239 + $0x40] sm:$0xff]
          %v488 = vld [vmem:[%s239 + $0x48] sm:$0xff]
          %v489 = vld [vmem:[%s239 + $0x50] sm:$0xff]
          %v490 = vld [vmem:[%s239 + $0x58] sm:$0xff]
          %v491 = vld [vmem:[%s239 + $0x60] sm:$0xff]
          %v492 = vld [vmem:[%s239 + $0x68] sm:$0xff]
          %v493 = vld [vmem:[%s239 + $0x70] sm:$0xff]
          %v494 = vld [vmem:[%s239 + $0x78] sm:$0xff]
          %v495 = vld [vmem:[%s239 + $0x80] sm:$0xff]
          %v496 = vld [vmem:[%s239 + $0x88] sm:$0xff]
          %v497 = vld [vmem:[%s239 + $0x90] sm:$0xff]
          %v498 = vld [vmem:[%s239 + $0x98] sm:$0xff]
          %v499 = vld [vmem:[%s239 + $0xa0] sm:$0xff]
          %v500 = vld [vmem:[%s239 + $0xa8] sm:$0xff]
          %v501 = vld [vmem:[%s239 + $0xb0] sm:$0xff]
          %v502 = vld [vmem:[%s239 + $0xb8] sm:$0xff]
          %v503 = vld [vmem:[%s239 + $0xc0] sm:$0xff]
          %v504 = vld [vmem:[%s239 + $0xc8] sm:$0xff]
          %v505 = vld [vmem:[%s239 + $0xd0] sm:$0xff]
          %v506 = vld [vmem:[%s239 + $0xd8] sm:$0xff]
          %v507 = vld [vmem:[%s239 + $0xe0] sm:$0xff]
          %v508 = vld [vmem:[%s239 + $0xe8] sm:$0xff]
          %v509 = vld [vmem:[%s239 + $0xf0] sm:$0xff]
          %v510 = vld [vmem:[%s239 + $0xf8] sm:$0xff]
          %v511 = vld [vmem:[%s239 + $0x100] sm:$0xff]
          %v512 = vld [vmem:[%s239 + $0x108] sm:$0xff]
          %v513 = vld [vmem:[%s239 + $0x110] sm:$0xff]
          %v514 = vld [vmem:[%s239 + $0x118] sm:$0xff]
          %v515 = vld [vmem:[%s239 + $0x120] sm:$0xff]
          %v516 = vld [vmem:[%s239 + $0x128] sm:$0xff]
          %v517 = vld [vmem:[%s239 + $0x130] sm:$0xff]
          %v518 = vld [vmem:[%s239 + $0x138] sm:$0xff]
          %v519 = vld [vmem:[%s239 + $0x140] sm:$0xff]
          %v520 = vld [vmem:[%s239 + $0x148] sm:$0xff]
          %v521 = vld [vmem:[%s239 + $0x150] sm:$0xff]
          %v522 = vld [vmem:[%s239 + $0x158] sm:$0xff]
          %v523 = vld [vmem:[%s239 + $0x160] sm:$0xff]
          %v524 = vld [vmem:[%s239 + $0x168] sm:$0xff]
          %v525 = vld [vmem:[%s239 + $0x170] sm:$0xff]
          %v526 = vld [vmem:[%s239 + $0x178] sm:$0xff]
          %v527 = vld [vmem:[%s239 + $0x180] sm:$0xff]
          %v528 = vld [vmem:[%s239 + $0x188] sm:$0xff]
          %v529 = vld [vmem:[%s239 + $0x190] sm:$0xff]
          %v530 = vld [vmem:[%s239 + $0x198] sm:$0xff]
          %v531 = vld [vmem:[%s239 + $0x1a0] sm:$0xff]
          %v532 = vld [vmem:[%s239 + $0x1a8] sm:$0xff]
          %v533 = vld [vmem:[%s239 + $0x1b0] sm:$0xff]
          %v534 = vld [vmem:[%s239 + $0x1b8] sm:$0xff]
          %v535 = vld [vmem:[%s239 + $0x1c0] sm:$0xff]
          %v536 = vld [vmem:[%s239 + $0x1c8] sm:$0xff]
          %v537 = vld [vmem:[%s239 + $0x1d0] sm:$0xff]
          %v538 = vld [vmem:[%s239 + $0x1d8] sm:$0xff]
          %v539 = vld [vmem:[%s239 + $0x1e0] sm:$0xff]
          %v540 = vld [vmem:[%s239 + $0x1e8] sm:$0xff]
          %v541 = vld [vmem:[%s239 + $0x1f0] sm:$0xff]
          %v542 = vld [vmem:[%s239 + $0x1f8] sm:$0xff]
          %v543 = vld [vmem:[%s239 + $0x200] sm:$0xff]
          %v544 = vld [vmem:[%s239 + $0x208] sm:$0xff]
          %v545 = vld [vmem:[%s239 + $0x210] sm:$0xff]
          %v546 = vld [vmem:[%s239 + $0x218] sm:$0xff]
          %v547 = vld [vmem:[%s239 + $0x220] sm:$0xff]
          %v548 = vld [vmem:[%s239 + $0x228] sm:$0xff]
          %v549 = vld [vmem:[%s239 + $0x230] sm:$0xff]
          %v550 = vld [vmem:[%s239 + $0x238] sm:$0xff]
          %v551 = vld [vmem:[%s239 + $0x240] sm:$0xff]
          %v552 = vld [vmem:[%s239 + $0x248] sm:$0xff]
          %v553 = vld [vmem:[%s239 + $0x250] sm:$0xff]
          %v554 = vld [vmem:[%s239 + $0x258] sm:$0xff]
          %v555 = vld [vmem:[%s239 + $0x260] sm:$0xff]
          %v556 = vld [vmem:[%s239 + $0x268] sm:$0xff]
          %v557 = vld [vmem:[%s239 + $0x270] sm:$0xff]
          %v558 = vld [vmem:[%s239 + $0x278] sm:$0xff]
          %v559 = vld [vmem:[%s239 + $0x280] sm:$0xff]
          %v560 = vld [vmem:[%s239 + $0x288] sm:$0xff]
          %v561 = vld [vmem:[%s239 + $0x290] sm:$0xff]
          %v562 = vld [vmem:[%s239 + $0x298] sm:$0xff]
          %v563 = vld [vmem:[%s239 + $0x2a0] sm:$0xff]
          %v564 = vld [vmem:[%s239 + $0x2a8] sm:$0xff]
          %v565 = vld [vmem:[%s239 + $0x2b0] sm:$0xff]
          %v566 = vld [vmem:[%s239 + $0x2b8] sm:$0xff]
          %v567 = vld [vmem:[%s239 + $0x2c0] sm:$0xff]
          %v568 = vld [vmem:[%s239 + $0x2c8] sm:$0xff]
          %v569 = vld [vmem:[%s239 + $0x2d0] sm:$0xff]
          %v570 = vld [vmem:[%s239 + $0x2d8] sm:$0xff]
          %v571 = vld [vmem:[%s239 + $0x2e0] sm:$0xff]
          %v572 = vld [vmem:[%s239 + $0x2e8] sm:$0xff]
          %v573 = vld [vmem:[%s239 + $0x2f0] sm:$0xff]
          %v574 = vld [vmem:[%s239 + $0x2f8] sm:$0xff]
          %v575 = vld [vmem:[%s239 + $0x300] sm:$0xff]
          %v576 = vld [vmem:[%s239 + $0x308] sm:$0xff]
          %v577 = vld [vmem:[%s239 + $0x310] sm:$0xff]
          %v578 = vld [vmem:[%s239 + $0x318] sm:$0xff]
          %v579 = vld [vmem:[%s239 + $0x320] sm:$0xff]
          %v580 = vld [vmem:[%s239 + $0x328] sm:$0xff]
          %v581 = vld [vmem:[%s239 + $0x330] sm:$0xff]
          %v582 = vld [vmem:[%s239 + $0x338] sm:$0xff]
          %v583 = vld [vmem:[%s239 + $0x340] sm:$0xff]
          %v584 = vld [vmem:[%s239 + $0x348] sm:$0xff]
          %v585 = vld [vmem:[%s239 + $0x350] sm:$0xff]
          %v586 = vld [vmem:[%s239 + $0x358] sm:$0xff]
          %v587 = vld [vmem:[%s239 + $0x360] sm:$0xff]
          %v588 = vld [vmem:[%s239 + $0x368] sm:$0xff]
          %v589 = vld [vmem:[%s239 + $0x370] sm:$0xff]
          %v590 = vld [vmem:[%s239 + $0x378] sm:$0xff]
          %v591 = vld [vmem:[%s239 + $0x380] sm:$0xff]
          %v592 = vld [vmem:[%s239 + $0x388] sm:$0xff]
          %v593 = vld [vmem:[%s239 + $0x390] sm:$0xff]
          %v594 = vld [vmem:[%s239 + $0x398] sm:$0xff]
          %v595 = vld [vmem:[%s239 + $0x3a0] sm:$0xff]
          %v596 = vld [vmem:[%s239 + $0x3a8] sm:$0xff]
          %v597 = vld [vmem:[%s239 + $0x3b0] sm:$0xff]
          %v598 = vld [vmem:[%s239 + $0x3b8] sm:$0xff]
          %v599 = vld [vmem:[%s239 + $0x3c0] sm:$0xff]
          %v600 = vld [vmem:[%s239 + $0x3c8] sm:$0xff]
          %v601 = vld [vmem:[%s239 + $0x3d0] sm:$0xff]
          %v602 = vld [vmem:[%s239 + $0x3d8] sm:$0xff]
          %v603 = vld [vmem:[%s239 + $0x3e0] sm:$0xff]
          %v604 = vld [vmem:[%s239 + $0x3e8] sm:$0xff]
          %v605 = vld [vmem:[%s239 + $0x3f0] sm:$0xff]
          %v606 = vld [vmem:[%s239 + $0x3f8] sm:$0xff]
          %v607 = vld [vmem:[%s248] sm:$0xf]
          %v609 = vlaneseq
          %v610 = vshrl.u32 %v609, 7
          %v611 = vsub.s32 0, %v610
          %v612 = vrot.slane %v607, %v611
          %v613 = vlaneseq
          %v614 = vshrl.u32 %v613, 7
          %v615 = vsub.s32 1, %v614
          %v616 = vrot.slane %v607, %v615
          %v617 = vlaneseq
          %v618 = vshrl.u32 %v617, 7
          %v619 = vsub.s32 2, %v618
          %v620 = vrot.slane %v607, %v619
          %v621 = vlaneseq
          %v622 = vshrl.u32 %v621, 7
          %v623 = vsub.s32 3, %v622
          %v624 = vrot.slane %v607, %v623
          %v631 = vunpack.c.l.b16 %v477
          %v632 = vunpack.c.h.b16 %v477
          %v633 = vunpack.c.l.b16 %v478
          %v634 = vunpack.c.h.b16 %v478
          %v635 = vpack.c.b16 %v631, %v631
          %v636 = vpack.c.b16 %v632, %v632
          %v637 = vpack.c.b16 %v633, %v633
          %v638 = vpack.c.b16 %v634, %v634
          %v771 = vunpack.c.l.b16 %v479
          %v772 = vunpack.c.h.b16 %v479
          %v773 = vunpack.c.l.b16 %v480
          %v774 = vunpack.c.h.b16 %v480
          %v775 = vunpack.c.l.b16 %v481
          %v776 = vunpack.c.h.b16 %v481
          %v777 = vunpack.c.l.b16 %v482
          %v778 = vunpack.c.h.b16 %v482
          %v779 = vunpack.c.l.b16 %v483
          %v780 = vunpack.c.h.b16 %v483
          %v781 = vunpack.c.l.b16 %v484
          %v782 = vunpack.c.h.b16 %v484
          %v783 = vunpack.c.l.b16 %v485
          %v784 = vunpack.c.h.b16 %v485
          %v785 = vunpack.c.l.b16 %v486
          %v786 = vunpack.c.h.b16 %v486
          %v787 = vunpack.c.l.b16 %v487
          %v788 = vunpack.c.h.b16 %v487
          %v789 = vunpack.c.l.b16 %v488
          %v790 = vunpack.c.h.b16 %v488
          %v791 = vunpack.c.l.b16 %v489
          %v792 = vunpack.c.h.b16 %v489
          %v793 = vunpack.c.l.b16 %v490
          %v794 = vunpack.c.h.b16 %v490
          %v795 = vunpack.c.l.b16 %v491
          %v796 = vunpack.c.h.b16 %v491
          %v797 = vunpack.c.l.b16 %v492
          %v798 = vunpack.c.h.b16 %v492
          %v799 = vunpack.c.l.b16 %v493
          %v800 = vunpack.c.h.b16 %v493
          %v801 = vunpack.c.l.b16 %v494
          %v802 = vunpack.c.h.b16 %v494
          %v803 = vunpack.c.l.b16 %v495
          %v804 = vunpack.c.h.b16 %v495
          %v805 = vunpack.c.l.b16 %v496
          %v806 = vunpack.c.h.b16 %v496
          %v807 = vunpack.c.l.b16 %v497
          %v808 = vunpack.c.h.b16 %v497
          %v809 = vunpack.c.l.b16 %v498
          %v810 = vunpack.c.h.b16 %v498
          %v811 = vunpack.c.l.b16 %v499
          %v812 = vunpack.c.h.b16 %v499
          %v813 = vunpack.c.l.b16 %v500
          %v814 = vunpack.c.h.b16 %v500
          %v815 = vunpack.c.l.b16 %v501
          %v816 = vunpack.c.h.b16 %v501
          %v817 = vunpack.c.l.b16 %v502
          %v818 = vunpack.c.h.b16 %v502
          %v819 = vunpack.c.l.b16 %v503
          %v820 = vunpack.c.h.b16 %v503
          %v821 = vunpack.c.l.b16 %v504
          %v822 = vunpack.c.h.b16 %v504
          %v823 = vunpack.c.l.b16 %v505
          %v824 = vunpack.c.h.b16 %v505
          %v825 = vunpack.c.l.b16 %v506
          %v826 = vunpack.c.h.b16 %v506
          %v827 = vunpack.c.l.b16 %v507
          %v828 = vunpack.c.h.b16 %v507
          %v829 = vunpack.c.l.b16 %v508
          %v830 = vunpack.c.h.b16 %v508
          %v831 = vunpack.c.l.b16 %v509
          %v832 = vunpack.c.h.b16 %v509
          %v833 = vunpack.c.l.b16 %v510
          %v834 = vunpack.c.h.b16 %v510
          %v835 = vunpack.c.l.b16 %v511
          %v836 = vunpack.c.h.b16 %v511
          %v837 = vunpack.c.l.b16 %v512
          %v838 = vunpack.c.h.b16 %v512
          %v839 = vunpack.c.l.b16 %v513
          %v840 = vunpack.c.h.b16 %v513
          %v841 = vunpack.c.l.b16 %v514
          %v842 = vunpack.c.h.b16 %v514
          %v843 = vunpack.c.l.b16 %v515
          %v844 = vunpack.c.h.b16 %v515
          %v845 = vunpack.c.l.b16 %v516
          %v846 = vunpack.c.h.b16 %v516
          %v847 = vunpack.c.l.b16 %v517
          %v848 = vunpack.c.h.b16 %v517
          %v849 = vunpack.c.l.b16 %v518
          %v850 = vunpack.c.h.b16 %v518
          %v851 = vunpack.c.l.b16 %v519
          %v852 = vunpack.c.h.b16 %v519
          %v853 = vunpack.c.l.b16 %v520
          %v854 = vunpack.c.h.b16 %v520
          %v855 = vunpack.c.l.b16 %v521
          %v856 = vunpack.c.h.b16 %v521
          %v857 = vunpack.c.l.b16 %v522
          %v858 = vunpack.c.h.b16 %v522
          %v859 = vunpack.c.l.b16 %v523
          %v860 = vunpack.c.h.b16 %v523
          %v861 = vunpack.c.l.b16 %v524
          %v862 = vunpack.c.h.b16 %v524
          %v863 = vunpack.c.l.b16 %v525
          %v864 = vunpack.c.h.b16 %v525
          %v865 = vunpack.c.l.b16 %v526
          %v866 = vunpack.c.h.b16 %v526
          %v867 = vunpack.c.l.b16 %v527
          %v868 = vunpack.c.h.b16 %v527
          %v869 = vunpack.c.l.b16 %v528
          %v870 = vunpack.c.h.b16 %v528
          %v871 = vunpack.c.l.b16 %v529
          %v872 = vunpack.c.h.b16 %v529
          %v873 = vunpack.c.l.b16 %v530
          %v874 = vunpack.c.h.b16 %v530
          %v875 = vunpack.c.l.b16 %v531
          %v876 = vunpack.c.h.b16 %v531
          %v877 = vunpack.c.l.b16 %v532
          %v878 = vunpack.c.h.b16 %v532
          %v879 = vunpack.c.l.b16 %v533
          %v880 = vunpack.c.h.b16 %v533
          %v881 = vunpack.c.l.b16 %v534
          %v882 = vunpack.c.h.b16 %v534
          %v883 = vunpack.c.l.b16 %v535
          %v884 = vunpack.c.h.b16 %v535
          %v885 = vunpack.c.l.b16 %v536
          %v886 = vunpack.c.h.b16 %v536
          %v887 = vunpack.c.l.b16 %v537
          %v888 = vunpack.c.h.b16 %v537
          %v889 = vunpack.c.l.b16 %v538
          %v890 = vunpack.c.h.b16 %v538
          %v891 = vunpack.c.l.b16 %v539
          %v892 = vunpack.c.h.b16 %v539
          %v893 = vunpack.c.l.b16 %v540
          %v894 = vunpack.c.h.b16 %v540
          %v895 = vunpack.c.l.b16 %v541
          %v896 = vunpack.c.h.b16 %v541
          %v897 = vunpack.c.l.b16 %v542
          %v898 = vunpack.c.h.b16 %v542
          %v899 = vunpack.c.l.b16 %v543
          %v900 = vunpack.c.h.b16 %v543
          %v901 = vunpack.c.l.b16 %v544
          %v902 = vunpack.c.h.b16 %v544
          %v903 = vunpack.c.l.b16 %v545
          %v904 = vunpack.c.h.b16 %v545
          %v905 = vunpack.c.l.b16 %v546
          %v906 = vunpack.c.h.b16 %v546
          %v907 = vunpack.c.l.b16 %v547
          %v908 = vunpack.c.h.b16 %v547
          %v909 = vunpack.c.l.b16 %v548
          %v910 = vunpack.c.h.b16 %v548
          %v911 = vunpack.c.l.b16 %v549
          %v912 = vunpack.c.h.b16 %v549
          %v913 = vunpack.c.l.b16 %v550
          %v914 = vunpack.c.h.b16 %v550
          %v915 = vunpack.c.l.b16 %v551
          %v916 = vunpack.c.h.b16 %v551
          %v917 = vunpack.c.l.b16 %v552
          %v918 = vunpack.c.h.b16 %v552
          %v919 = vunpack.c.l.b16 %v553
          %v920 = vunpack.c.h.b16 %v553
          %v921 = vunpack.c.l.b16 %v554
          %v922 = vunpack.c.h.b16 %v554
          %v923 = vunpack.c.l.b16 %v555
          %v924 = vunpack.c.h.b16 %v555
          %v925 = vunpack.c.l.b16 %v556
          %v926 = vunpack.c.h.b16 %v556
          %v927 = vunpack.c.l.b16 %v557
          %v928 = vunpack.c.h.b16 %v557
          %v929 = vunpack.c.l.b16 %v558
          %v930 = vunpack.c.h.b16 %v558
          %v931 = vunpack.c.l.b16 %v559
          %v932 = vunpack.c.h.b16 %v559
          %v933 = vunpack.c.l.b16 %v560
          %v934 = vunpack.c.h.b16 %v560
          %v935 = vunpack.c.l.b16 %v561
          %v936 = vunpack.c.h.b16 %v561
          %v937 = vunpack.c.l.b16 %v562
          %v938 = vunpack.c.h.b16 %v562
          %v939 = vunpack.c.l.b16 %v563
          %v940 = vunpack.c.h.b16 %v563
          %v941 = vunpack.c.l.b16 %v564
          %v942 = vunpack.c.h.b16 %v564
          %v943 = vunpack.c.l.b16 %v565
          %v944 = vunpack.c.h.b16 %v565
          %v945 = vunpack.c.l.b16 %v566
          %v946 = vunpack.c.h.b16 %v566
          %v947 = vunpack.c.l.b16 %v567
          %v948 = vunpack.c.h.b16 %v567
          %v949 = vunpack.c.l.b16 %v568
          %v950 = vunpack.c.h.b16 %v568
          %v951 = vunpack.c.l.b16 %v569
          %v952 = vunpack.c.h.b16 %v569
          %v953 = vunpack.c.l.b16 %v570
          %v954 = vunpack.c.h.b16 %v570
          %v955 = vunpack.c.l.b16 %v571
          %v956 = vunpack.c.h.b16 %v571
          %v957 = vunpack.c.l.b16 %v572
          %v958 = vunpack.c.h.b16 %v572
          %v959 = vunpack.c.l.b16 %v573
          %v960 = vunpack.c.h.b16 %v573
          %v961 = vunpack.c.l.b16 %v574
          %v962 = vunpack.c.h.b16 %v574
          %v963 = vunpack.c.l.b16 %v575
          %v964 = vunpack.c.h.b16 %v575
          %v965 = vunpack.c.l.b16 %v576
          %v966 = vunpack.c.h.b16 %v576
          %v967 = vunpack.c.l.b16 %v577
          %v968 = vunpack.c.h.b16 %v577
          %v969 = vunpack.c.l.b16 %v578
          %v970 = vunpack.c.h.b16 %v578
          %v971 = vunpack.c.l.b16 %v579
          %v972 = vunpack.c.h.b16 %v579
          %v973 = vunpack.c.l.b16 %v580
          %v974 = vunpack.c.h.b16 %v580
          %v975 = vunpack.c.l.b16 %v581
          %v976 = vunpack.c.h.b16 %v581
          %v977 = vunpack.c.l.b16 %v582
          %v978 = vunpack.c.h.b16 %v582
          %v979 = vunpack.c.l.b16 %v583
          %v980 = vunpack.c.h.b16 %v583
          %v981 = vunpack.c.l.b16 %v584
          %v982 = vunpack.c.h.b16 %v584
          %v983 = vunpack.c.l.b16 %v585
          %v984 = vunpack.c.h.b16 %v585
          %v985 = vunpack.c.l.b16 %v586
          %v986 = vunpack.c.h.b16 %v586
          %v987 = vunpack.c.l.b16 %v587
          %v988 = vunpack.c.h.b16 %v587
          %v989 = vunpack.c.l.b16 %v588
          %v990 = vunpack.c.h.b16 %v588
          %v991 = vunpack.c.l.b16 %v589
          %v992 = vunpack.c.h.b16 %v589
          %v993 = vunpack.c.l.b16 %v590
          %v994 = vunpack.c.h.b16 %v590
          %v995 = vunpack.c.l.b16 %v591
          %v996 = vunpack.c.h.b16 %v591
          %v997 = vunpack.c.l.b16 %v592
          %v998 = vunpack.c.h.b16 %v592
          %v999 = vunpack.c.l.b16 %v593
          %v1000 = vunpack.c.h.b16 %v593
          %v1001 = vunpack.c.l.b16 %v594
          %v1002 = vunpack.c.h.b16 %v594
          %v1003 = vunpack.c.l.b16 %v595
          %v1004 = vunpack.c.h.b16 %v595
          %v1005 = vunpack.c.l.b16 %v596
          %v1006 = vunpack.c.h.b16 %v596
          %v1007 = vunpack.c.l.b16 %v597
          %v1008 = vunpack.c.h.b16 %v597
          %v1009 = vunpack.c.l.b16 %v598
          %v1010 = vunpack.c.h.b16 %v598
          %v1011 = vunpack.c.l.b16 %v599
          %v1012 = vunpack.c.h.b16 %v599
          %v1013 = vunpack.c.l.b16 %v600
          %v1014 = vunpack.c.h.b16 %v600
          %v1015 = vunpack.c.l.b16 %v601
          %v1016 = vunpack.c.h.b16 %v601
          %v1017 = vunpack.c.l.b16 %v602
          %v1018 = vunpack.c.h.b16 %v602
          %v1019 = vunpack.c.l.b16 %v603
          %v1020 = vunpack.c.h.b16 %v603
          %v1021 = vunpack.c.l.b16 %v604
          %v1022 = vunpack.c.h.b16 %v604
          %v1023 = vunpack.c.l.b16 %v605
          %v1024 = vunpack.c.h.b16 %v605
          %v1025 = vunpack.c.l.b16 %v606
          %v1026 = vunpack.c.h.b16 %v606
          %v1027 = vpack.c.b16 %v775, %v771
          %v1028 = vpack.c.b16 %v776, %v772
          %v1029 = vpack.c.b16 %v777, %v773
          %v1030 = vpack.c.b16 %v778, %v774
          %v1031 = vpack.c.b16 %v783, %v779
          %v1032 = vpack.c.b16 %v784, %v780
          %v1033 = vpack.c.b16 %v785, %v781
          %v1034 = vpack.c.b16 %v786, %v782
          %v1035 = vpack.c.b16 %v791, %v787
          %v1036 = vpack.c.b16 %v792, %v788
          %v1037 = vpack.c.b16 %v793, %v789
          %v1038 = vpack.c.b16 %v794, %v790
          %v1039 = vpack.c.b16 %v799, %v795
          %v1040 = vpack.c.b16 %v800, %v796
          %v1041 = vpack.c.b16 %v801, %v797
          %v1042 = vpack.c.b16 %v802, %v798
          %v1043 = vpack.c.b16 %v807, %v803
          %v1044 = vpack.c.b16 %v808, %v804
          %v1045 = vpack.c.b16 %v809, %v805
          %v1046 = vpack.c.b16 %v810, %v806
          %v1047 = vpack.c.b16 %v815, %v811
          %v1048 = vpack.c.b16 %v816, %v812
          %v1049 = vpack.c.b16 %v817, %v813
          %v1050 = vpack.c.b16 %v818, %v814
          %v1051 = vpack.c.b16 %v823, %v819
          %v1052 = vpack.c.b16 %v824, %v820
          %v1053 = vpack.c.b16 %v825, %v821
          %v1054 = vpack.c.b16 %v826, %v822
          %v1055 = vpack.c.b16 %v831, %v827
          %v1056 = vpack.c.b16 %v832, %v828
          %v1057 = vpack.c.b16 %v833, %v829
          %v1058 = vpack.c.b16 %v834, %v830
          %v1059 = vpack.c.b16 %v839, %v835
          %v1060 = vpack.c.b16 %v840, %v836
          %v1061 = vpack.c.b16 %v841, %v837
          %v1062 = vpack.c.b16 %v842, %v838
          %v1063 = vpack.c.b16 %v847, %v843
          %v1064 = vpack.c.b16 %v848, %v844
          %v1065 = vpack.c.b16 %v849, %v845
          %v1066 = vpack.c.b16 %v850, %v846
          %v1067 = vpack.c.b16 %v855, %v851
          %v1068 = vpack.c.b16 %v856, %v852
          %v1069 = vpack.c.b16 %v857, %v853
          %v1070 = vpack.c.b16 %v858, %v854
          %v1071 = vpack.c.b16 %v863, %v859
          %v1072 = vpack.c.b16 %v864, %v860
          %v1073 = vpack.c.b16 %v865, %v861
          %v1074 = vpack.c.b16 %v866, %v862
          %v1075 = vpack.c.b16 %v871, %v867
          %v1076 = vpack.c.b16 %v872, %v868
          %v1077 = vpack.c.b16 %v873, %v869
          %v1078 = vpack.c.b16 %v874, %v870
          %v1079 = vpack.c.b16 %v879, %v875
          %v1080 = vpack.c.b16 %v880, %v876
          %v1081 = vpack.c.b16 %v881, %v877
          %v1082 = vpack.c.b16 %v882, %v878
          %v1083 = vpack.c.b16 %v887, %v883
          %v1084 = vpack.c.b16 %v888, %v884
          %v1085 = vpack.c.b16 %v889, %v885
          %v1086 = vpack.c.b16 %v890, %v886
          %v1087 = vpack.c.b16 %v895, %v891
          %v1088 = vpack.c.b16 %v896, %v892
          %v1089 = vpack.c.b16 %v897, %v893
          %v1090 = vpack.c.b16 %v898, %v894
          %v1091 = vpack.c.b16 %v903, %v899
          %v1092 = vpack.c.b16 %v904, %v900
          %v1093 = vpack.c.b16 %v905, %v901
          %v1094 = vpack.c.b16 %v906, %v902
          %v1095 = vpack.c.b16 %v911, %v907
          %v1096 = vpack.c.b16 %v912, %v908
          %v1097 = vpack.c.b16 %v913, %v909
          %v1098 = vpack.c.b16 %v914, %v910
          %v1099 = vpack.c.b16 %v919, %v915
          %v1100 = vpack.c.b16 %v920, %v916
          %v1101 = vpack.c.b16 %v921, %v917
          %v1102 = vpack.c.b16 %v922, %v918
          %v1103 = vpack.c.b16 %v927, %v923
          %v1104 = vpack.c.b16 %v928, %v924
          %v1105 = vpack.c.b16 %v929, %v925
          %v1106 = vpack.c.b16 %v930, %v926
          %v1107 = vpack.c.b16 %v935, %v931
          %v1108 = vpack.c.b16 %v936, %v932
          %v1109 = vpack.c.b16 %v937, %v933
          %v1110 = vpack.c.b16 %v938, %v934
          %v1111 = vpack.c.b16 %v943, %v939
          %v1112 = vpack.c.b16 %v944, %v940
          %v1113 = vpack.c.b16 %v945, %v941
          %v1114 = vpack.c.b16 %v946, %v942
          %v1115 = vpack.c.b16 %v951, %v947
          %v1116 = vpack.c.b16 %v952, %v948
          %v1117 = vpack.c.b16 %v953, %v949
          %v1118 = vpack.c.b16 %v954, %v950
          %v1119 = vpack.c.b16 %v959, %v955
          %v1120 = vpack.c.b16 %v960, %v956
          %v1121 = vpack.c.b16 %v961, %v957
          %v1122 = vpack.c.b16 %v962, %v958
          %v1123 = vpack.c.b16 %v967, %v963
          %v1124 = vpack.c.b16 %v968, %v964
          %v1125 = vpack.c.b16 %v969, %v965
          %v1126 = vpack.c.b16 %v970, %v966
          %v1127 = vpack.c.b16 %v975, %v971
          %v1128 = vpack.c.b16 %v976, %v972
          %v1129 = vpack.c.b16 %v977, %v973
          %v1130 = vpack.c.b16 %v978, %v974
          %v1131 = vpack.c.b16 %v983, %v979
          %v1132 = vpack.c.b16 %v984, %v980
          %v1133 = vpack.c.b16 %v985, %v981
          %v1134 = vpack.c.b16 %v986, %v982
          %v1135 = vpack.c.b16 %v991, %v987
          %v1136 = vpack.c.b16 %v992, %v988
          %v1137 = vpack.c.b16 %v993, %v989
          %v1138 = vpack.c.b16 %v994, %v990
          %v1139 = vpack.c.b16 %v999, %v995
          %v1140 = vpack.c.b16 %v1000, %v996
          %v1141 = vpack.c.b16 %v1001, %v997
          %v1142 = vpack.c.b16 %v1002, %v998
          %v1143 = vpack.c.b16 %v1007, %v1003
          %v1144 = vpack.c.b16 %v1008, %v1004
          %v1145 = vpack.c.b16 %v1009, %v1005
          %v1146 = vpack.c.b16 %v1010, %v1006
          %v1147 = vpack.c.b16 %v1015, %v1011
          %v1148 = vpack.c.b16 %v1016, %v1012
          %v1149 = vpack.c.b16 %v1017, %v1013
          %v1150 = vpack.c.b16 %v1018, %v1014
          %v1151 = vpack.c.b16 %v1023, %v1019
          %v1152 = vpack.c.b16 %v1024, %v1020
          %v1153 = vpack.c.b16 %v1025, %v1021
          %v1154 = vpack.c.b16 %v1026, %v1022
          %1283 = vmatprep.subr.bf16.mxu0 %v1028
          %1284 = vmatpush1.bf16.msra.mxu0 %v1027
          %1285 = vmatprep.subr.bf16.mxu0 %v1032
          %1286 = vmatpush1.bf16.msra.mxu0 %v1031
          %1287 = vmatprep.subr.bf16.mxu0 %v1036
          %1288 = vmatpush1.bf16.msra.mxu0 %v1035
          %1289 = vmatprep.subr.bf16.mxu0 %v1040
          %1290 = vmatpush1.bf16.msra.mxu0 %v1039
          %1291 = vmatprep.subr.bf16.mxu0 %v1044
          %1292 = vmatpush1.bf16.msra.mxu0 %v1043
          %1293 = vmatprep.subr.bf16.mxu0 %v1048
          %1294 = vmatpush1.bf16.msra.mxu0 %v1047
          %1295 = vmatprep.subr.bf16.mxu0 %v1052
          %1296 = vmatpush1.bf16.msra.mxu0 %v1051
          %1297 = vmatprep.subr.bf16.mxu0 %v1056
          %1298 = vmatpush1.bf16.msra.mxu0 %v1055
          %1299 = vmatprep.subr.bf16.mxu0 %v1060
          %1300 = vmatpush1.bf16.msra.mxu0 %v1059
          %1301 = vmatprep.subr.bf16.mxu0 %v1064
          %1302 = vmatpush1.bf16.msra.mxu0 %v1063
          %1303 = vmatprep.subr.bf16.mxu0 %v1068
          %1304 = vmatpush1.bf16.msra.mxu0 %v1067
          %1305 = vmatprep.subr.bf16.mxu0 %v1072
          %1306 = vmatpush1.bf16.msra.mxu0 %v1071
          %1307 = vmatprep.subr.bf16.mxu0 %v1076
          %1308 = vmatpush1.bf16.msra.mxu0 %v1075
          %1309 = vmatprep.subr.bf16.mxu0 %v1080
          %1310 = vmatpush1.bf16.msra.mxu0 %v1079
          %1311 = vmatprep.subr.bf16.mxu0 %v1084
          %1312 = vmatpush1.bf16.msra.mxu0 %v1083
          %1313 = vmatprep.subr.bf16.mxu0 %v1088
          %1314 = vmatpush1.bf16.msra.mxu0 %v1087
          %1315 = vmatprep.mubr.bf16.mxu0 %v636
          %1316 = vmatmul.mubr.bf16.gmra.mrb[0].mxu0 %v635
          %v1317 = vpop.f32.mrb[0].mxu0
          %v1318 = vadd.f32 %v612, %v1317
          %v1319 = vpop.f32.mrb[0].mxu0
          %v1320 = vadd.f32 %v616, %v1319
          %v1321 = vpop.f32.mrb[0].mxu0
          %v1322 = vpop.f32.mrb[0].mxu0
          %1323 = vdwg.mxu0
          %1324 = vmatprep.subr.bf16.mxu0 %v1092
          %1325 = vmatpush1.bf16.msra.mxu0 %v1091
          %1326 = vmatprep.subr.bf16.mxu0 %v1096
          %1327 = vmatpush1.bf16.msra.mxu0 %v1095
          %1328 = vmatprep.subr.bf16.mxu0 %v1100
          %1329 = vmatpush1.bf16.msra.mxu0 %v1099
          %1330 = vmatprep.subr.bf16.mxu0 %v1104
          %1331 = vmatpush1.bf16.msra.mxu0 %v1103
          %1332 = vmatprep.subr.bf16.mxu0 %v1108
          %1333 = vmatpush1.bf16.msra.mxu0 %v1107
          %1334 = vmatprep.subr.bf16.mxu0 %v1112
          %1335 = vmatpush1.bf16.msra.mxu0 %v1111
          %1336 = vmatprep.subr.bf16.mxu0 %v1116
          %1337 = vmatpush1.bf16.msra.mxu0 %v1115
          %1338 = vmatprep.subr.bf16.mxu0 %v1120
          %1339 = vmatpush1.bf16.msra.mxu0 %v1119
          %1340 = vmatprep.subr.bf16.mxu0 %v1124
          %1341 = vmatpush1.bf16.msra.mxu0 %v1123
          %1342 = vmatprep.subr.bf16.mxu0 %v1128
          %1343 = vmatpush1.bf16.msra.mxu0 %v1127
          %1344 = vmatprep.subr.bf16.mxu0 %v1132
          %1345 = vmatpush1.bf16.msra.mxu0 %v1131
          %1346 = vmatprep.subr.bf16.mxu0 %v1136
          %1347 = vmatpush1.bf16.msra.mxu0 %v1135
          %1348 = vmatprep.subr.bf16.mxu0 %v1140
          %1349 = vmatpush1.bf16.msra.mxu0 %v1139
          %1350 = vmatprep.subr.bf16.mxu0 %v1144
          %1351 = vmatpush1.bf16.msra.mxu0 %v1143
          %1352 = vmatprep.subr.bf16.mxu0 %v1148
          %1353 = vmatpush1.bf16.msra.mxu0 %v1147
          %1354 = vmatprep.subr.bf16.mxu0 %v1152
          %1355 = vmatpush1.bf16.msra.mxu0 %v1151
          %1356 = vmatprep.mubr.bf16.mxu0 %v638
          %1357 = vmatmul.mubr.bf16.gmra.mrb[0].mxu0 %v637
          %v1358 = vpop.f32.mrb[0].mxu0
          %v1359 = vadd.f32 %v1318, %v1358
          %v1360 = vpop.f32.mrb[0].mxu0
          %v1361 = vadd.f32 %v1320, %v1360
          %v1362 = vpop.f32.mrb[0].mxu0
          %v1363 = vpop.f32.mrb[0].mxu0
          %1364 = vdwg.mxu0
          %1365 = vmatprep.subr.bf16.mxu0 %v1030
          %1366 = vmatpush1.bf16.msra.mxu0 %v1029
          %1367 = vmatprep.subr.bf16.mxu0 %v1034
          %1368 = vmatpush1.bf16.msra.mxu0 %v1033
          %1369 = vmatprep.subr.bf16.mxu0 %v1038
          %1370 = vmatpush1.bf16.msra.mxu0 %v1037
          %1371 = vmatprep.subr.bf16.mxu0 %v1042
          %1372 = vmatpush1.bf16.msra.mxu0 %v1041
          %1373 = vmatprep.subr.bf16.mxu0 %v1046
          %1374 = vmatpush1.bf16.msra.mxu0 %v1045
          %1375 = vmatprep.subr.bf16.mxu0 %v1050
          %1376 = vmatpush1.bf16.msra.mxu0 %v1049
          %1377 = vmatprep.subr.bf16.mxu0 %v1054
          %1378 = vmatpush1.bf16.msra.mxu0 %v1053
          %1379 = vmatprep.subr.bf16.mxu0 %v1058
          %1380 = vmatpush1.bf16.msra.mxu0 %v1057
          %1381 = vmatprep.subr.bf16.mxu0 %v1062
          %1382 = vmatpush1.bf16.msra.mxu0 %v1061
          %1383 = vmatprep.subr.bf16.mxu0 %v1066
          %1384 = vmatpush1.bf16.msra.mxu0 %v1065
          %1385 = vmatprep.subr.bf16.mxu0 %v1070
          %1386 = vmatpush1.bf16.msra.mxu0 %v1069
          %1387 = vmatprep.subr.bf16.mxu0 %v1074
          %1388 = vmatpush1.bf16.msra.mxu0 %v1073
          %1389 = vmatprep.subr.bf16.mxu0 %v1078
          %1390 = vmatpush1.bf16.msra.mxu0 %v1077
          %1391 = vmatprep.subr.bf16.mxu0 %v1082
          %1392 = vmatpush1.bf16.msra.mxu0 %v1081
          %1393 = vmatprep.subr.bf16.mxu0 %v1086
          %1394 = vmatpush1.bf16.msra.mxu0 %v1085
          %1395 = vmatprep.subr.bf16.mxu0 %v1090
          %1396 = vmatpush1.bf16.msra.mxu0 %v1089
          %1397 = vmatprep.mubr.bf16.mxu0 %v636
          %1398 = vmatmul.mubr.bf16.gmra.mrb[0].mxu0 %v635
          %v1399 = vpop.f32.mrb[0].mxu0
          %v1400 = vadd.f32 %v620, %v1399
          %v1401 = vpop.f32.mrb[0].mxu0
          %v1402 = vadd.f32 %v624, %v1401
          %v1403 = vpop.f32.mrb[0].mxu0
          %v1404 = vpop.f32.mrb[0].mxu0
          %1405 = vdwg.mxu0
          %1406 = vmatprep.subr.bf16.mxu0 %v1094
          %1407 = vmatpush1.bf16.msra.mxu0 %v1093
          %1408 = vmatprep.subr.bf16.mxu0 %v1098
          %1409 = vmatpush1.bf16.msra.mxu0 %v1097
          %1410 = vmatprep.subr.bf16.mxu0 %v1102
          %1411 = vmatpush1.bf16.msra.mxu0 %v1101
          %1412 = vmatprep.subr.bf16.mxu0 %v1106
          %1413 = vmatpush1.bf16.msra.mxu0 %v1105
          %1414 = vmatprep.subr.bf16.mxu0 %v1110
          %1415 = vmatpush1.bf16.msra.mxu0 %v1109
          %1416 = vmatprep.subr.bf16.mxu0 %v1114
          %1417 = vmatpush1.bf16.msra.mxu0 %v1113
          %1418 = vmatprep.subr.bf16.mxu0 %v1118
          %1419 = vmatpush1.bf16.msra.mxu0 %v1117
          %1420 = vmatprep.subr.bf16.mxu0 %v1122
          %1421 = vmatpush1.bf16.msra.mxu0 %v1121
          %1422 = vmatprep.subr.bf16.mxu0 %v1126
          %1423 = vmatpush1.bf16.msra.mxu0 %v1125
          %1424 = vmatprep.subr.bf16.mxu0 %v1130
          %1425 = vmatpush1.bf16.msra.mxu0 %v1129
          %1426 = vmatprep.subr.bf16.mxu0 %v1134
          %1427 = vmatpush1.bf16.msra.mxu0 %v1133
          %1428 = vmatprep.subr.bf16.mxu0 %v1138
          %1429 = vmatpush1.bf16.msra.mxu0 %v1137
          %1430 = vmatprep.subr.bf16.mxu0 %v1142
          %1431 = vmatpush1.bf16.msra.mxu0 %v1141
          %1432 = vmatprep.subr.bf16.mxu0 %v1146
          %1433 = vmatpush1.bf16.msra.mxu0 %v1145
          %1434 = vmatprep.subr.bf16.mxu0 %v1150
          %1435 = vmatpush1.bf16.msra.mxu0 %v1149
          %1436 = vmatprep.subr.bf16.mxu0 %v1154
          %1437 = vmatpush1.bf16.msra.mxu0 %v1153
          %1438 = vmatprep.mubr.bf16.mxu0 %v638
          %1439 = vmatmul.mubr.bf16.gmra.mrb[0].mxu0 %v637
          %v1440 = vpop.f32.mrb[0].mxu0
          %v1441 = vadd.f32 %v1400, %v1440
          %v1442 = vpop.f32.mrb[0].mxu0
          %v1443 = vadd.f32 %v1402, %v1442
          %v1444 = vpop.f32.mrb[0].mxu0
          %v1445 = vpop.f32.mrb[0].mxu0
          %1446 = vdwg.mxu0
          %vm1447 = vcmp.ge.f32.partialorder %v1359, 0.0
          %vm1448 = vcmp.ge.f32.partialorder %v1361, 0.0
          %vm1449 = vcmp.ge.f32.partialorder %v1441, 0.0
          %vm1450 = vcmp.ge.f32.partialorder %v1443, 0.0
          %v1451 = vmul.f32 %v1359, 0.2
          %v1452 = vmul.f32 %v1361, 0.2
          %v1453 = vmul.f32 %v1441, 0.2
          %v1454 = vmul.f32 %v1443, 0.2
          %v1455 = vsel %vm1447, %v1359, %v1451
          %v1456 = vsel %vm1448, %v1361, %v1452
          %v1457 = vsel %vm1449, %v1441, %v1453
          %v1458 = vsel %vm1450, %v1443, %v1454
          %v1459 = vmul.f32 %v1455, 1.4142135
          %v1460 = vmul.f32 %v1456, 1.4142135
          %v1461 = vmul.f32 %v1457, 1.4142135
          %v1462 = vmul.f32 %v1458, 1.4142135
          %v1463 = vpack.c.bf16 %v1459, %v1459
          %v1464 = vpack.c.bf16 %v1460, %v1460
          %v1465 = vpack.c.bf16 %v1461, %v1461
          %v1466 = vpack.c.bf16 %v1462, %v1462
          %v1471 = vunpack.c.l.b16 %v1463
          %v1472 = vunpack.c.l.b16 %v1464
          %v1473 = vunpack.c.l.b16 %v1465
          %v1474 = vunpack.c.l.b16 %v1466
          %v1475 = vpack.c.b16 %v1472, %v1471
          %v1476 = vpack.c.b16 %v1474, %v1473
          %1479 = vst [vmem:[#allocation2] sm:$0xff] %v1475
          %1480 = vst [vmem:[#allocation2 + $0x8] sm:$0xff] %v1476
        $region60: #{tpu_custom_call.1} parent=35 // pred_fallthru
          _
        %p1481 = scmp.eq.s32.totalorder %s18, 7
        // Predicated region
        $region61: #{tpu_custom_call.1} parent=35 // pred_check
          %p1482 = pneg %p1481
        $region62: #{tpu_custom_call.1} parent=35 // pred_check_branch
          %1484 = sbr.rel (%p1482) target = $region64
        $region63: #{tpu_custom_call.1} parent=35 // pred_region
          %v1485 = vld [vmem:[#allocation2] sm:$0xff]
          %v1486 = vld [vmem:[#allocation2 + $0x8] sm:$0xff]
          %v1487 = vunpack.c.l.bf16 %v1485
          %v1488 = vunpack.c.h.bf16 %v1485
          %v1489 = vunpack.c.l.bf16 %v1486
          %v1490 = vunpack.c.h.bf16 %v1486
          %1491 = vst [vmem:[#allocation10] sm:$0xff] %v1487
          %1492 = vst [vmem:[#allocation10 + $0x8] sm:$0xff] %v1488
          %1493 = vst [vmem:[#allocation10 + $0x10] sm:$0xff] %v1489
          %1494 = vst [vmem:[#allocation10 + $0x18] sm:$0xff] %v1490
        $region64: #{tpu_custom_call.1} parent=35 // pred_fallthru
          _
        // Predicated region
        $region65: #{tpu_custom_call.1} parent=35 // pred_check
          %p1495 = pneg %p131
        $region66: #{tpu_custom_call.1} parent=35 // pred_check_branch
          %1497 = sbr.rel (%p1495) target = $region68
        $region67: #{tpu_custom_call.1} parent=35 // pred_region
          %s1499 = ssub.s32 512, 512
          %1500 = vsyncadd [#allocation5], %s1499
          %s1502 = sshll.u32 [#allocation10], 4
          %s1503 = int_to_ptr.vmem [resolvable:$true] %s1502
          %1505 = dma.vmem_to_hbm [thread:$0]  %s1503, 512, %s4, [#allocation5]
        $region68: #{tpu_custom_call.1} parent=35 // pred_fallthru
          _
        // Predicated region
        $region69: #{tpu_custom_call.1} parent=35 // pred_check
          %p1506 = pneg %p131
        $region70: #{tpu_custom_call.1} parent=35 // pred_check_branch
          %1508 = sbr.rel (%p1506) target = $region72
        $region71: #{tpu_custom_call.1} parent=35 // pred_region
          %1509 = dma.done [#allocation5], 512
        $region72: #{tpu_custom_call.1} parent=35 // pred_fallthru
          _
      $region36: #{tpu_custom_call.1} parent=5 // pred_fallthru
        _
      %p1510 = scmp.le.s32.totalorder 2, %s13
      // Predicated region
      $region73: #{tpu_custom_call.1} parent=5 // pred_check
        %p1511 = pneg %p1510
      $region74: #{tpu_custom_call.1} parent=5 // pred_check_branch
        %1513 = sbr.rel (%p1511) target = $region76
      $region75: #{tpu_custom_call.1} parent=5 // pred_region
        %s1514 = ssub.s32 %s13, 2
      $region76: #{tpu_custom_call.1} parent=5 // pred_fallthru
        _
    $region6: #{tpu_custom_call.1} parent=1 // loop_footer
      %s17 = sadd.s32 1, %s13
    $region7: #{tpu_custom_call.1} parent=1 // loop_footer_branch
      %12 = sbr.rel target = $region3
    $region8: #{tpu_custom_call.1} parent=1 // loop_exit
      _
    %1515 = vsyncpa [#allocation4], 1
    %s1516 = scalar_lea.sflag [#allocation4], 1
    %1517 = vsyncpa %s1516, 1
    %1518 = vsyncpa [#allocation7], 1
    %1519 = vsyncpa [#allocation5], 1
    %s1520 = scalar_lea.sflag [#allocation5], 1
    %1521 = vsyncpa %s1520, 1

</llo_original>
